<compile_context>
chip_gen: v6e
topology: v6e:2x2x1
jax: 0.10.0
libtpu: 0.0.40
codegen_flags: <defaults>
</compile_context>

<pallas_src>
import functools

import jax
import jax.numpy as jnp
from jax.experimental import pallas as pl
from jax.experimental.pallas import tpu as pltpu


def _round_up(v, m):
    return (v + m - 1) // m * m


def _pick_lane_tile(m, target=2048):
    """Largest multiple-of-128 tile <= target that divides m (else full m)."""
    if m <= target:
        return m
    t = (target // 128) * 128
    while t >= 128:
        if m % t == 0:
            return t
        t -= 128
    return m


# ----------------------------------------------------------------------------
# Pallas kernels
# ----------------------------------------------------------------------------
def _conv3x3_stats_kernel(x_ref, cmask_ref, omask_ref, scale_ref, bias_ref,
                          w_ref, y_ref, st_ref, *, taps_off, M, shift, chunk,
                          apply_in_affine, compute_dtype):
    """Channel-first fused 3x3 conv (+ optional BN-affine/ReLU prologue) + stats.

    x_ref     : (1, Cin, Lpad)      row-flattened zero-padded frame
    cmask_ref : (1, Lpad) f32       1.0 on interior pixels of the padded frame
    omask_ref : (1, M)    f32       1.0 on valid output columns
    scale_ref : (Cin, 1)  f32       previous-stage BN scale (iff prologue)
    bias_ref  : (Cin, 1)  f32       previous-stage BN bias  (iff prologue)
    w_ref     : (Cout, 9*Cin)       folded conv weights (tap-major, cin-minor)
    y_ref     : (1, Cout, out_len)  out_len == Lpad (next stage's frame, data
                                    placed at lane offset `shift`) or == M
    st_ref    : (1, Cout, 2) f32    per-image [sum, sum_sq] over valid columns
    """
    x = x_ref[0]                                              # (Cin, Lpad)
    if apply_in_affine:
        # BN1 affine + ReLU in f32 (bf16 storage promotes against f32 scale),
        # then restore exact zeros on every padding / junk position so the
        # conv's zero-padding semantics hold even if junk were NaN/Inf.
        xa = jnp.maximum(x * scale_ref[...] + bias_ref[...], 0.0)
        x = jnp.where(cmask_ref[...] > 0.5, xa, 0.0).astype(compute_dtype)
    elif x.dtype != compute_dtype:
        x = x.astype(compute_dtype)

    w = w_ref[...]
    c_out = w.shape[0]
    out_len = y_ref.shape[2]
    out_dtype = y_ref.dtype

    if out_len > M:
        # Writing straight into the next stage's padded frame: zero head and
        # tail once so no frame position is ever left uninitialized.
        y_ref[0, :, :shift] = jnp.zeros((c_out, shift), out_dtype)
        y_ref[0, :, shift + M:] = jnp.zeros((c_out, out_len - shift - M),
                                            out_dtype)
        base = shift
    else:
        base = 0

    s_acc = jnp.zeros((c_out, 1), jnp.float32)
    q_acc = jnp.zeros((c_out, 1), jnp.float32)
    # The 9 conv taps are contiguous lane-shifted slices of the flattened
    # frame; stacking them along channels gives a (9*Cin, chunk) operand for a
    # single folded-K MXU matmul per chunk.  Chunking bounds VMEM/vreg usage.
    # TODO(synk): if a bundle dump shows the slice relayouts (not vmatmul)
    # saturating, generate the shifts with pltpu.roll (XLU slot) instead.
    for c0 in range(0, M, chunk):
        csz = min(chunk, M - c0)
        xk = jnp.concatenate(
            [x[:, off + c0: off + c0 + csz] for off in taps_off], axis=0)
        acc = jnp.dot(w, xk, preferred_element_type=jnp.float32)  # (Cout, csz)
        y_ref[0, :, base + c0: base + c0 + csz] = acc.astype(out_dtype)
        valid = omask_ref[:, c0:c0 + csz] > 0.5                   # (1, csz)
        accm = jnp.where(valid, acc, 0.0)
        s_acc = s_acc + jnp.sum(accm, axis=1, keepdims=True)
        q_acc = q_acc + jnp.sum(accm * acc, axis=1, keepdims=True)
    st_ref[0] = jnp.concatenate([s_acc, q_acc], axis=1)           # (Cout, 2)


def _bn_relu_kernel(x_ref, scale_ref, bias_ref, o_ref):
    # x_ref/o_ref: (1, C, tile) lane-dense; scale/bias: (C, 1) broadcast.
    o_ref[0] = jnp.maximum(x_ref[0] * scale_ref[...] + bias_ref[...], 0.0)


# ----------------------------------------------------------------------------
# pallas_call wrappers
# ----------------------------------------------------------------------------
def conv3x3_stage(x_frame, cmask, omask, scale_in, bias_in, w_cf, *, Wp, M,
                  out_len, shift, apply_in_affine, compute_dtype, out_dtype,
                  chunk):
    """One Conv3x3 (stride 1, pad 1, no bias) stage on a channel-first frame.

    Returns (y, stats): y is (N, Cout, out_len) conv output (placed at lane
    offset `shift` if out_len > M), stats is (N, Cout, 2) = [sum, sum_sq].
    """
    N, c_in, Lpad = x_frame.shape
    c_out = w_cf.shape[0]
    taps_off = tuple(dy * Wp + dx for dy in range(3) for dx in range(3))
    kernel = functools.partial(
        _conv3x3_stats_kernel, taps_off=taps_off, M=M, shift=shift,
        chunk=chunk, apply_in_affine=apply_in_affine,
        compute_dtype=compute_dtype)
    return pl.pallas_call(
        kernel,
        out_shape=(jax.ShapeDtypeStruct((N, c_out, out_len), out_dtype),
                   jax.ShapeDtypeStruct((N, c_out, 2), jnp.float32)),
        grid=(N,),
        in_specs=[
            pl.BlockSpec((1, c_in, Lpad), lambda n: (n, 0, 0)),
            pl.BlockSpec((1, Lpad), lambda n: (0, 0)),
            pl.BlockSpec((1, M), lambda n: (0, 0)),
            pl.BlockSpec((c_in, 1), lambda n: (0, 0)),
            pl.BlockSpec((c_in, 1), lambda n: (0, 0)),
            pl.BlockSpec((c_out, 9 * c_in), lambda n: (0, 0)),
        ],
        out_specs=(pl.BlockSpec((1, c_out, out_len), lambda n: (n, 0, 0)),
                   pl.BlockSpec((1, c_out, 2), lambda n: (n, 0, 0))),
        compiler_params=pltpu.CompilerParams(
            dimension_semantics=("parallel",),
            vmem_limit_bytes=64 * 1024 * 1024),
    )(x_frame, cmask, omask, scale_in, bias_in, w_cf)


def bn_relu_cf(x, scale, bias):
    """BatchNorm affine + ReLU in lane-dense channel-first (N, C, M) layout."""
    N, C, M = x.shape
    tile = _pick_lane_tile(M)
    return pl.pallas_call(
        _bn_relu_kernel,
        out_shape=jax.ShapeDtypeStruct((N, C, M), x.dtype),
        grid=(N, M // tile),
        in_specs=[pl.BlockSpec((1, C, tile), lambda n, t: (n, 0, t)),
                  pl.BlockSpec((C, 1), lambda n, t: (0, 0)),
                  pl.BlockSpec((C, 1), lambda n, t: (0, 0))],
        out_specs=pl.BlockSpec((1, C, tile), lambda n, t: (n, 0, t)),
        compiler_params=pltpu.CompilerParams(
            dimension_semantics=("parallel", "parallel")),
    )(x, scale.reshape(C, 1), bias.reshape(C, 1))


def _bn_affine(stats, gamma, beta, count, eps=1e-5):
    """Turn kernel-emitted [sum, sum_sq] into BN scale/bias (training mode)."""
    # TODO(synk): E[x^2]-E[x]^2 in f32 cancels if activations develop a large
    # common mean; switch to a shifted / two-pass accumulation if that happens.
    s = jnp.sum(stats[:, :, 0], axis=0)
    q = jnp.sum(stats[:, :, 1], axis=0)
    mean = s / count
    var = q / count - mean * mean            # biased variance, like PyTorch BN
    scale = gamma / jnp.sqrt(var + eps)
    bias = beta - mean * scale
    return scale, bias


# ----------------------------------------------------------------------------
# Up.forward glue (upsample / pad / concat) -- pure JAX data movement (NCHW)
# ----------------------------------------------------------------------------
def bilinear_upsample_x2_align_corners(x):
    """nn.Upsample(scale_factor=2, mode='bilinear', align_corners=True), NCHW."""
    N, C, H, W = x.shape
    Ho, Wo = 2 * H, 2 * W
    ys = jnp.arange(Ho, dtype=jnp.float32) * (H - 1) / (Ho - 1)
    xs = jnp.arange(Wo, dtype=jnp.float32) * (W - 1) / (Wo - 1)
    y0 = jnp.floor(ys).astype(jnp.int32)
    x0 = jnp.floor(xs).astype(jnp.int32)
    y1 = jnp.minimum(y0 + 1, H - 1)
    x1 = jnp.minimum(x0 + 1, W - 1)
    wy = (ys - y0.astype(jnp.float32))[None, None, :, None]
    wx = (xs - x0.astype(jnp.float32))[None, None, None, :]
    rows = x[:, :, y0, :] * (1.0 - wy) + x[:, :, y1, :] * wy
    return rows[:, :, :, x0] * (1.0 - wx) + rows[:, :, :, x1] * wx


def up_forward(params, x1_nchw, x2_nchw, compute_dtype=jnp.float32, eps=1e-5,
               lane_chunk=4096):
    """Exact Up.forward: upsample x1, pad to x2, cat([x2, x1], C), DoubleConv."""
    x1 = bilinear_upsample_x2_align_corners(x1_nchw)
    diffY = x2_nchw.shape[2] - x1.shape[2]
    diffX = x2_nchw.shape[3] - x1.shape[3]
    x1 = jnp.pad(x1, ((0, 0), (0, 0),
                      (diffY // 2, diffY - diffY // 2),
                      (diffX // 2, diffX - diffX // 2)))
    x = jnp.concatenate([x2_nchw, x1], axis=1)              # (N, Cin, H, W)

    N, c_in, H, W = x.shape
    c_mid = params["w1"].shape[-1]
    c_out = params["w2"].shape[-1]

    # Flattened zero-padded frame geometry.  Width is padded to a multiple of
    # 8 (sublane-aligned taps, 8-aligned M); the extra junk columns are masked.
    # One extra bottom pad row gives the largest shifted slice room, so a
    # single jnp.pad builds the whole frame.
    Wp = _round_up(W + 2, 8)
    M = H * Wp                        # conv output columns per image (junk incl.)
    Lpad = (H + 3) * Wp               # flattened frame length
    shift = Wp + 1                    # frame position of output pixel (0, 0)
    chunk = M if M <= lane_chunk else lane_chunk

    x_frame = jnp.pad(x, ((0, 0), (0, 0), (1, 2), (1, Wp - W - 1))) \
        .reshape(N, c_in, Lpad).astype(compute_dtype)

    p = jnp.arange(Lpad, dtype=jnp.int32)
    cmask = (((p // Wp >= 1) & (p // Wp <= H) &
              (p % Wp >= 1) & (p % Wp <= W))
             .astype(jnp.float32)[None, :])                  # (1, Lpad)
    r = jnp.arange(M, dtype=jnp.int32)
    omask = ((r % Wp) < W).astype(jnp.float32)[None, :]      # (1, M)
    count = N * H * W

    # Folded conv weights, channel-first: (Cout, 9*Cin), tap-major / cin-minor.
    w1 = params["w1"].reshape(9 * c_in, c_mid).T.astype(compute_dtype)
    w2 = params["w2"].reshape(9 * c_mid, c_out).T.astype(compute_dtype)

    # --- conv1 (+ BN1 stats); writes straight into conv2's padded frame ------
    dummy = jnp.zeros((c_in, 1), jnp.float32)
    y1, st1 = conv3x3_stage(
        x_frame, cmask, omask, dummy, dummy, w1, Wp=Wp, M=M, out_len=Lpad,
        shift=shift, apply_in_affine=False, compute_dtype=compute_dtype,
        out_dtype=compute_dtype, chunk=chunk)
    scale1, bias1 = _bn_affine(st1, params["g1"], params["b1"], count, eps)

    # --- conv2 with fused BN1-affine + ReLU + zero-pad prologue (+ BN2 stats)
    y2, st2 = conv3x3_stage(
        y1, cmask, omask, scale1.reshape(c_mid, 1), bias1.reshape(c_mid, 1),
        w2, Wp=Wp, M=M, out_len=M, shift=0, apply_in_affine=True,
        compute_dtype=compute_dtype, out_dtype=jnp.float32, chunk=chunk)
    scale2, bias2 = _bn_affine(st2, params["g2"], params["b2"], count, eps)

    # --- final BN2 affine + ReLU in the conv's native lane-dense layout ------
    y = bn_relu_cf(y2, scale2, bias2)                        # (N, Cout, M) f32
    # Single compaction pass: drop junk columns; already NCHW.
    return y.reshape(N, c_out, H, Wp)[:, :, :, :W]


# ----------------------------------------------------------------------------
# Pure-JAX reference (for correctness check)
# ----------------------------------------------------------------------------
def _conv_ref(x, w, compute_dtype):
    return jax.lax.conv_general_dilated(
        x.astype(compute_dtype), w.astype(compute_dtype),
        window_strides=(1, 1), padding="SAME",
        dimension_numbers=("NCHW", "HWIO", "NCHW"),
        preferred_element_type=jnp.float32)


def _bn_relu_ref(x, g, b, eps=1e-5):
    mean = jnp.mean(x, axis=(0, 2, 3), keepdims=True)
    var = jnp.mean(jnp.square(x - mean), axis=(0, 2, 3), keepdims=True)
    y = ((x - mean) / jnp.sqrt(var + eps) * g[None, :, None, None]
         + b[None, :, None, None])
    return jnp.maximum(y, 0.0)


def up_forward_ref(params, x1_nchw, x2_nchw, compute_dtype=jnp.float32):
    x1 = bilinear_upsample_x2_align_corners(x1_nchw)
    diffY = x2_nchw.shape[2] - x1.shape[2]
    diffX = x2_nchw.shape[3] - x1.shape[3]
    x1 = jnp.pad(x1, ((0, 0), (0, 0),
                      (diffY // 2, diffY - diffY // 2),
                      (diffX // 2, diffX - diffX // 2)))
    x = jnp.concatenate([x2_nchw, x1], axis=1)
    h = _bn_relu_ref(_conv_ref(x, params["w1"], compute_dtype),
                     params["g1"], params["b1"])
    h = _bn_relu_ref(_conv_ref(h, params["w2"], compute_dtype),
                     params["g2"], params["b2"])
    return h


# ----------------------------------------------------------------------------
if __name__ == "__main__":
    key = jax.random.PRNGKey(0)
    k1, k2, k3, k4 = jax.random.split(key, 4)

    in_channels, out_channels = 8, 4
    c1 = in_channels // 2          # channels of x1 (the low-res feature map)
    c2 = in_channels - c1          # channels of x2 (the skip connection)

    # x1: low-resolution feature map (upsampled 2x), x2: skip connection (NCHW).
    x1 = jax.random.normal(k1, (2, c1, 8, 8), jnp.float32)
    x2 = jax.random.normal(k2, (2, c2, 16, 16), jnp.float32)

    params = {
        # Conv2d(in_channels, out_channels, 3, 1, 1, bias=False) -> HWIO
        "w1": 0.1 * jax.random.normal(k3, (3, 3, in_channels, out_channels),
                                      jnp.float32),
        # BatchNorm2d default init: gamma=1, beta=0 (training-mode batch stats)
        "g1": jnp.ones((out_channels,), jnp.float32),
        "b1": jnp.zeros((out_channels,), jnp.float32),
        "w2": 0.1 * jax.random.normal(k4, (3, 3, out_channels, out_channels),
                                      jnp.float32),
        "g2": jnp.ones((out_channels,), jnp.float32),
        "b2": jnp.zeros((out_channels,), jnp.float32),
    }

    # Exact-semantics path (f32 matmuls / f32 intermediates), tight check.
    out = jax.block_until_ready(
        up_forward(params, x1, x2, compute_dtype=jnp.float32))
    assert out.shape == (2, out_channels, 16, 16), out.shape
    ref = jax.block_until_ready(
        up_forward_ref(params, x1, x2, compute_dtype=jnp.float32))
    err = float(jnp.max(jnp.abs(out - ref)))
    assert jnp.allclose(out, ref, atol=1e-3, rtol=1e-3), err

    # bf16 MXU fast path (f32 accumulation, bf16 intermediate), looser check.
    out_bf = jax.block_until_ready(
        up_forward(params, x1, x2, compute_dtype=jnp.bfloat16))
    ref_bf = jax.block_until_ready(
        up_forward_ref(params, x1, x2, compute_dtype=jnp.bfloat16))
    err_bf = float(jnp.max(jnp.abs(out_bf - ref_bf)))
    assert jnp.allclose(out_bf, ref_bf, atol=3e-2, rtol=3e-2), err_bf

    print("KERNEL_OK")
</pallas_src>

<mosaic_0001>
module attributes {stable_mosaic.version = 11 : i64} {
  func.func @_conv3x3_stats_kernel(%arg0: i32, %arg1: memref<1x8x456xf32, #tpu.memory_space<vmem>>, %arg2: memref<1x456xf32, #tpu.memory_space<vmem>>, %arg3: memref<1x384xf32, #tpu.memory_space<vmem>>, %arg4: memref<8x1xf32, #tpu.memory_space<vmem>>, %arg5: memref<8x1xf32, #tpu.memory_space<vmem>>, %arg6: memref<4x72xf32, #tpu.memory_space<vmem>>, %arg7: memref<1x4x456xf32, #tpu.memory_space<vmem>>, %arg8: memref<1x4x2xf32, #tpu.memory_space<vmem>>) attributes {dimension_semantics = [#tpu.dimension_semantics<parallel>], iteration_bounds = array<i64: 2>, scalar_prefetch = 0 : i64, scratch_operands = 0 : i64, tpu.core_type = #tpu.core_type<tc>, window_params = [{transform_indices = @transform_0, window_bounds = array<i64: 1, 8, 456>}, {pipeline_mode = #tpu.pipeline_mode<synchronous>, transform_indices = @transform_1, window_bounds = array<i64: 1, 456>}, {pipeline_mode = #tpu.pipeline_mode<synchronous>, transform_indices = @transform_2, window_bounds = array<i64: 1, 384>}, {pipeline_mode = #tpu.pipeline_mode<synchronous>, transform_indices = @transform_3, window_bounds = array<i64: 8, 1>}, {pipeline_mode = #tpu.pipeline_mode<synchronous>, transform_indices = @transform_4, window_bounds = array<i64: 8, 1>}, {pipeline_mode = #tpu.pipeline_mode<synchronous>, transform_indices = @transform_5, window_bounds = array<i64: 4, 72>}, {transform_indices = @transform_6, window_bounds = array<i64: 1, 4, 456>}, {transform_indices = @transform_7, window_bounds = array<i64: 1, 4, 2>}]} {
    %c0 = arith.constant 0 : index
    %c0_0 = arith.constant 0 : index
    %c0_1 = arith.constant 0 : index
    %0 = vector.load %arg1[%c0, %c0_0, %c0_1] : memref<1x8x456xf32, #tpu.memory_space<vmem>>, vector<1x8x456xf32>
    %1 = vector.shape_cast %0 : vector<1x8x456xf32> to vector<8x456xf32>
    %c0_2 = arith.constant 0 : index
    %c0_3 = arith.constant 0 : index
    %2 = vector.load %arg6[%c0_2, %c0_3] : memref<4x72xf32, #tpu.memory_space<vmem>>, vector<4x72xf32>
    %cst = arith.constant 0.000000e+00 : f32
    %3 = vector.broadcast %cst : f32 to vector<4x25xf32>
    %c0_4 = arith.constant 0 : index
    %c0_5 = arith.constant 0 : index
    %c0_6 = arith.constant 0 : index
    %4 = vector.load %arg7[%c0_4, %c0_5, %c0_6] : memref<1x4x456xf32, #tpu.memory_space<vmem>>, vector<1x4x25xf32>
    %5 = vector.shape_cast %4 : vector<1x4x25xf32> to vector<4x25xf32>
    %6 = vector.shape_cast %3 : vector<4x25xf32> to vector<1x4x25xf32>
    tpu.vector_store %arg7[%c0_4, %c0_5, %c0_6], %6 {strides = array<i32>} : memref<1x4x456xf32, #tpu.memory_space<vmem>>, vector<1x4x25xf32>,
    %cst_7 = arith.constant 0.000000e+00 : f32
    %7 = vector.broadcast %cst_7 : f32 to vector<4x47xf32>
    %c0_8 = arith.constant 0 : index
    %c0_9 = arith.constant 0 : index
    %c409 = arith.constant 409 : index
    %8 = vector.load %arg7[%c0_8, %c0_9, %c409] : memref<1x4x456xf32, #tpu.memory_space<vmem>>, vector<1x4x47xf32>
    %9 = vector.shape_cast %8 : vector<1x4x47xf32> to vector<4x47xf32>
    %10 = vector.shape_cast %7 : vector<4x47xf32> to vector<1x4x47xf32>
    tpu.vector_store %arg7[%c0_8, %c0_9, %c409], %10 {strides = array<i32>} : memref<1x4x456xf32, #tpu.memory_space<vmem>>, vector<1x4x47xf32>,
    %cst_10 = arith.constant 0.000000e+00 : f32
    %11 = vector.broadcast %cst_10 : f32 to vector<4x1xf32>
    %cst_11 = arith.constant 0.000000e+00 : f32
    %12 = vector.broadcast %cst_11 : f32 to vector<4x1xf32>
    %13 = vector.extract_strided_slice %1 {offsets = [0, 0], sizes = [8, 384], strides = [1, 1]} : vector<8x456xf32> to vector<8x384xf32>
    %14 = vector.extract_strided_slice %1 {offsets = [0, 1], sizes = [8, 384], strides = [1, 1]} : vector<8x456xf32> to vector<8x384xf32>
    %15 = vector.extract_strided_slice %1 {offsets = [0, 2], sizes = [8, 384], strides = [1, 1]} : vector<8x456xf32> to vector<8x384xf32>
    %16 = vector.extract_strided_slice %1 {offsets = [0, 24], sizes = [8, 384], strides = [1, 1]} : vector<8x456xf32> to vector<8x384xf32>
    %17 = vector.extract_strided_slice %1 {offsets = [0, 25], sizes = [8, 384], strides = [1, 1]} : vector<8x456xf32> to vector<8x384xf32>
    %18 = vector.extract_strided_slice %1 {offsets = [0, 26], sizes = [8, 384], strides = [1, 1]} : vector<8x456xf32> to vector<8x384xf32>
    %19 = vector.extract_strided_slice %1 {offsets = [0, 48], sizes = [8, 384], strides = [1, 1]} : vector<8x456xf32> to vector<8x384xf32>
    %20 = vector.extract_strided_slice %1 {offsets = [0, 49], sizes = [8, 384], strides = [1, 1]} : vector<8x456xf32> to vector<8x384xf32>
    %21 = vector.extract_strided_slice %1 {offsets = [0, 50], sizes = [8, 384], strides = [1, 1]} : vector<8x456xf32> to vector<8x384xf32>
    %22 = tpu.concatenate %13, %14, %15, %16, %17, %18, %19, %20, %21 in 0 : vector<8x384xf32>, vector<8x384xf32>, vector<8x384xf32>, vector<8x384xf32>, vector<8x384xf32>, vector<8x384xf32>, vector<8x384xf32>, vector<8x384xf32>, vector<8x384xf32> -> vector<72x384xf32>
    %cst_12 = arith.constant dense<0.000000e+00> : vector<4x384xf32>
    %23 = tpu.matmul %2, %22, %cst_12 {dimension_numbers = #tpu.dot_dimension_numbers<[1], [0], [0], [1], [0, 0, 1, 1], [], []>} : vector<4x72xf32>, vector<72x384xf32>, vector<4x384xf32> -> vector<4x384xf32>
    %c0_13 = arith.constant 0 : index
    %c0_14 = arith.constant 0 : index
    %c25 = arith.constant 25 : index
    %24 = vector.load %arg7[%c0_13, %c0_14, %c25] : memref<1x4x456xf32, #tpu.memory_space<vmem>>, vector<1x4x384xf32>
    %25 = vector.shape_cast %24 : vector<1x4x384xf32> to vector<4x384xf32>
    %26 = vector.shape_cast %23 : vector<4x384xf32> to vector<1x4x384xf32>
    tpu.vector_store %arg7[%c0_13, %c0_14, %c25], %26 {strides = array<i32>} : memref<1x4x456xf32, #tpu.memory_space<vmem>>, vector<1x4x384xf32>,
    %c0_15 = arith.constant 0 : index
    %c0_16 = arith.constant 0 : index
    %27 = vector.load %arg3[%c0_15, %c0_16] : memref<1x384xf32, #tpu.memory_space<vmem>>, vector<1x384xf32>
    %cst_17 = arith.constant 5.000000e-01 : f32
    %28 = vector.broadcast %cst_17 : f32 to vector<1x384xf32>
    %29 = arith.cmpf ogt, %27, %28 : vector<1x384xf32>
    %cst_18 = arith.constant 0.000000e+00 : f32
    %30 = vector.shape_cast %29 : vector<1x384xi1> to vector<1x384xi1>
    %31 = vector.broadcast %30 : vector<1x384xi1> to vector<4x384xi1>
    %32 = vector.broadcast %cst_18 : f32 to vector<4x384xf32>
    %33 = arith.select %31, %23, %32 : vector<4x384xi1>, vector<4x384xf32>
    %cst_19 = arith.constant dense<0.000000e+00> : vector<4xf32>
    %34 = vector.multi_reduction <add>, %33, %cst_19 [1] : vector<4x384xf32> to vector<4xf32>
    %35 = vector.shape_cast %34 : vector<4xf32> to vector<4x1xf32>
    %36 = arith.addf %11, %35 : vector<4x1xf32>
    %37 = arith.mulf %33, %23 : vector<4x384xf32>
    %cst_20 = arith.constant dense<0.000000e+00> : vector<4xf32>
    %38 = vector.multi_reduction <add>, %37, %cst_20 [1] : vector<4x384xf32> to vector<4xf32>
    %39 = vector.shape_cast %38 : vector<4xf32> to vector<4x1xf32>
    %40 = arith.addf %12, %39 : vector<4x1xf32>
    %41 = tpu.concatenate %36, %40 in 1 : vector<4x1xf32>, vector<4x1xf32> -> vector<4x2xf32>
    %c0_21 = arith.constant 0 : index
    %c0_22 = arith.constant 0 : index
    %c0_23 = arith.constant 0 : index
    %42 = vector.load %arg8[%c0_21, %c0_22, %c0_23] : memref<1x4x2xf32, #tpu.memory_space<vmem>>, vector<1x4x2xf32>
    %43 = vector.shape_cast %42 : vector<1x4x2xf32> to vector<4x2xf32>
    %44 = vector.shape_cast %41 : vector<4x2xf32> to vector<1x4x2xf32>
    tpu.vector_store %arg8[%c0_21, %c0_22, %c0_23], %44 {strides = array<i32>} : memref<1x4x2xf32, #tpu.memory_space<vmem>>, vector<1x4x2xf32>,
    return
  }
  func.func @transform_0(%arg0: i32) -> (i32, i32, i32) {
    %c0_i32 = arith.constant 0 : i32
    %c0_i32_0 = arith.constant 0 : i32
    %c0_i32_1 = arith.constant 0 : i32
    return %arg0, %c0_i32, %c0_i32_0 : i32, i32, i32
  }
  func.func @transform_1(%arg0: i32) -> (i32, i32) {
    %c0_i32 = arith.constant 0 : i32
    %c0_i32_0 = arith.constant 0 : i32
    %c0_i32_1 = arith.constant 0 : i32
    return %c0_i32, %c0_i32_0 : i32, i32
  }
  func.func @transform_2(%arg0: i32) -> (i32, i32) {
    %c0_i32 = arith.constant 0 : i32
    %c0_i32_0 = arith.constant 0 : i32
    %c0_i32_1 = arith.constant 0 : i32
    return %c0_i32, %c0_i32_0 : i32, i32
  }
  func.func @transform_3(%arg0: i32) -> (i32, i32) {
    %c0_i32 = arith.constant 0 : i32
    %c0_i32_0 = arith.constant 0 : i32
    %c0_i32_1 = arith.constant 0 : i32
    return %c0_i32, %c0_i32_0 : i32, i32
  }
  func.func @transform_4(%arg0: i32) -> (i32, i32) {
    %c0_i32 = arith.constant 0 : i32
    %c0_i32_0 = arith.constant 0 : i32
    %c0_i32_1 = arith.constant 0 : i32
    return %c0_i32, %c0_i32_0 : i32, i32
  }
  func.func @transform_5(%arg0: i32) -> (i32, i32) {
    %c0_i32 = arith.constant 0 : i32
    %c0_i32_0 = arith.constant 0 : i32
    %c0_i32_1 = arith.constant 0 : i32
    return %c0_i32, %c0_i32_0 : i32, i32
  }
  func.func @transform_6(%arg0: i32) -> (i32, i32, i32) {
    %c0_i32 = arith.constant 0 : i32
    %c0_i32_0 = arith.constant 0 : i32
    %c0_i32_1 = arith.constant 0 : i32
    return %arg0, %c0_i32, %c0_i32_0 : i32, i32, i32
  }
  func.func @transform_7(%arg0: i32) -> (i32, i32, i32) {
    %c0_i32 = arith.constant 0 : i32
    %c0_i32_0 = arith.constant 0 : i32
    %c0_i32_1 = arith.constant 0 : i32
    return %arg0, %c0_i32, %c0_i32_0 : i32, i32, i32
  }
}

</mosaic_0001>

<llo_original>
// kernel: tpu_custom_call.1
$region0: #{tpu_custom_call.1}
  #allocation0 [shape = 'u32[]', space=smem, size = 0x4, offset = 0x4, fixed_abs, tag = 'smem constant byte address 0x4 - core index']
  #allocation1 [shape = 'u32[144,128]{1,0:T(1,128)}', space=vmem, size = 0x12000, scoped, tag = 'internal scratch']
  %s0 = inlined_call_operand.hbm [shape: f32[2,8,456], index: 0, kind: input, shape index: {}]
  %s1 = inlined_call_operand.vmem [shape: f32[1,456], index: 1, kind: input, shape index: {}]
  %s2 = inlined_call_operand.vmem [shape: f32[1,384], index: 2, kind: input, shape index: {}]
  %s3 = inlined_call_operand.vmem [shape: f32[8,1], index: 3, kind: input, shape index: {}]
  %s4 = inlined_call_operand.vmem [shape: f32[8,1], index: 4, kind: input, shape index: {}]
  %s5 = inlined_call_operand.vmem [shape: f32[4,72], index: 5, kind: input, shape index: {}]
  %s6 = inlined_call_operand.hbm [shape: f32[2,4,456], index: 6, kind: output, shape index: {0}]
  %s7 = inlined_call_operand.vmem [shape: f32[2,4,2], index: 7, kind: output, shape index: {1}]
  %8 = xla_tuple %s6, %s7
  %s9 = sld [smem:[#allocation0]]
  $region69: #{tpu_custom_call.1} parent=0
    _
  %s11 = ssub.s32 1, %s9
  %s12 = scalar_select 0, %s11, %s9
  $region1: #{tpu_custom_call.1} parent=0
    #allocation2 [shape = 'u8[32768]{0}', space=vmem, size = 0x8000, scoped, tag = 'input window, operand 0']
    #allocation3 [shape = 's32[2]{0}', space=sflag, size = 0x8, scoped, tag = 'scoped memory for tpu_custom_call.1']
    #allocation4 [shape = 's32[2]{0}', space=sflag, size = 0x8, scoped, tag = 'scoped memory for tpu_custom_call.1']
    #allocation5 [shape = 'u8[16384]{0}', space=vmem, size = 0x4000, scoped, tag = 'output window, operand 0']
    %13 = vsyncpa [#allocation3], 0
    %s14 = scalar_lea.sflag [#allocation3], 1
    %15 = vsyncpa %s14, 0
    %16 = vsyncpa [#allocation4], 0
    %s17 = scalar_lea.sflag [#allocation4], 1
    %18 = vsyncpa %s17, 0
    loop: start=0, step=1, limit=4
    $region2: #{tpu_custom_call.1} parent=1 // loop_pre_header
      _
    $region3: #{tpu_custom_call.1} parent=1 // loop_header
      %s20 = sphi 0, %s24
      %p21 = scmp.ge.s32.totalorder %s20, 4
      %s30 = sphi 0, %s32
      %s33 = sphi 0, %s30
      %s34 = sphi 0, %s33
      %s50 = sphi 0, %s34
      %s54 = sphi 0, %s54
      %s56 = sphi 0, %s54
      %s57 = sphi 0, %s56
      %s71 = sphi 0, %s57
      %s75 = sphi 0, %s75
      %s77 = sphi 0, %s75
      %s78 = sphi 0, %s77
      %s92 = sphi 0, %s78
      %s96 = sphi 0, %s96
      %s98 = sphi 0, %s96
      %s99 = sphi 0, %s98
      %s113 = sphi 0, %s99
      %s117 = sphi 0, %s117
      %s119 = sphi 0, %s117
      %s120 = sphi 0, %s119
      %s134 = sphi 0, %s120
      %s138 = sphi 0, %s138
      %s140 = sphi 0, %s138
      %s141 = sphi 0, %s140
      %s155 = sphi 0, %s141
      %s161 = sphi 0, %s163
      %s164 = sphi 0, %s161
      %s165 = sphi 0, %s164
      %s181 = sphi 0, %s165
      %s187 = sphi 0, %s189
      %s190 = sphi 0, %s187
      %s191 = sphi 0, %s190
      %s207 = sphi 0, %s191
    $region4: #{tpu_custom_call.1} parent=1 // loop_header_branch
      %23 = sbr.rel (%p21) target = $region8
    $region5: #{tpu_custom_call.1} parent=1 // loop_body
      %s25 = ssub.s32 %s20, 1
      %s26 = ssub.s32 %s20, 2
      %s27 = sadd.s32 %s20, 1
      %s28 = ssub.s32 %s20, %s27
      %p29 = scmp.eq.s32.totalorder %s28, 0
      %s31 = sadd.s32 %s30, 1
      %s32 = scalar_select %p29, %s30, %s31
      %p35 = pneg %p29
      %p36 = scmp.eq.s32.totalorder %s20, 1
      %p37 = por %p35, %p36
      %p38 = scmp.ne.s32.totalorder %s30, %s33
      %p39 = scmp.eq.s32.totalorder %s20, 0
      %p40 = por %p38, %p39
      %p41 = scmp.ne.s32.totalorder %s30, %s33
      %p42 = scmp.eq.s32.totalorder %s25, 1
      %p43 = por %p41, %p42
      %p44 = scmp.ne.s32.totalorder %s33, %s34
      %p45 = scmp.eq.s32.totalorder %s25, 0
      %p46 = por %p44, %p45
      %p47 = scmp.ne.s32.totalorder %s33, %s34
      %p48 = scmp.eq.s32.totalorder %s26, 1
      %p49 = por %p47, %p48
      %p51 = scmp.ne.s32.totalorder %s34, %s50
      %p52 = scmp.eq.s32.totalorder %s26, 0
      %p53 = por %p51, %p52
      %s55 = sadd.s32 %s54, 1
      %p58 = scmp.eq.s32.totalorder %s20, 1
      %p59 = scmp.ne.s32.totalorder %s54, %s56
      %p60 = scmp.eq.s32.totalorder %s20, 0
      %p61 = por %p59, %p60
      %p62 = scmp.ne.s32.totalorder %s54, %s56
      %p63 = scmp.eq.s32.totalorder %s25, 1
      %p64 = por %p62, %p63
      %p65 = scmp.ne.s32.totalorder %s56, %s57
      %p66 = scmp.eq.s32.totalorder %s25, 0
      %p67 = por %p65, %p66
      %p68 = scmp.ne.s32.totalorder %s56, %s57
      %p69 = scmp.eq.s32.totalorder %s26, 1
      %p70 = por %p68, %p69
      %p72 = scmp.ne.s32.totalorder %s57, %s71
      %p73 = scmp.eq.s32.totalorder %s26, 0
      %p74 = por %p72, %p73
      %s76 = sadd.s32 %s75, 1
      %p79 = scmp.eq.s32.totalorder %s20, 1
      %p80 = scmp.ne.s32.totalorder %s75, %s77
      %p81 = scmp.eq.s32.totalorder %s20, 0
      %p82 = por %p80, %p81
      %p83 = scmp.ne.s32.totalorder %s75, %s77
      %p84 = scmp.eq.s32.totalorder %s25, 1
      %p85 = por %p83, %p84
      %p86 = scmp.ne.s32.totalorder %s77, %s78
      %p87 = scmp.eq.s32.totalorder %s25, 0
      %p88 = por %p86, %p87
      %p89 = scmp.ne.s32.totalorder %s77, %s78
      %p90 = scmp.eq.s32.totalorder %s26, 1
      %p91 = por %p89, %p90
      %p93 = scmp.ne.s32.totalorder %s78, %s92
      %p94 = scmp.eq.s32.totalorder %s26, 0
      %p95 = por %p93, %p94
      %s97 = sadd.s32 %s96, 1
      %p100 = scmp.eq.s32.totalorder %s20, 1
      %p101 = scmp.ne.s32.totalorder %s96, %s98
      %p102 = scmp.eq.s32.totalorder %s20, 0
      %p103 = por %p101, %p102
      %p104 = scmp.ne.s32.totalorder %s96, %s98
      %p105 = scmp.eq.s32.totalorder %s25, 1
      %p106 = por %p104, %p105
      %p107 = scmp.ne.s32.totalorder %s98, %s99
      %p108 = scmp.eq.s32.totalorder %s25, 0
      %p109 = por %p107, %p108
      %p110 = scmp.ne.s32.totalorder %s98, %s99
      %p111 = scmp.eq.s32.totalorder %s26, 1
      %p112 = por %p110, %p111
      %p114 = scmp.ne.s32.totalorder %s99, %s113
      %p115 = scmp.eq.s32.totalorder %s26, 0
      %p116 = por %p114, %p115
      %s118 = sadd.s32 %s117, 1
      %p121 = scmp.eq.s32.totalorder %s20, 1
      %p122 = scmp.ne.s32.totalorder %s117, %s119
      %p123 = scmp.eq.s32.totalorder %s20, 0
      %p124 = por %p122, %p123
      %p125 = scmp.ne.s32.totalorder %s117, %s119
      %p126 = scmp.eq.s32.totalorder %s25, 1
      %p127 = por %p125, %p126
      %p128 = scmp.ne.s32.totalorder %s119, %s120
      %p129 = scmp.eq.s32.totalorder %s25, 0
      %p130 = por %p128, %p129
      %p131 = scmp.ne.s32.totalorder %s119, %s120
      %p132 = scmp.eq.s32.totalorder %s26, 1
      %p133 = por %p131, %p132
      %p135 = scmp.ne.s32.totalorder %s120, %s134
      %p136 = scmp.eq.s32.totalorder %s26, 0
      %p137 = por %p135, %p136
      %s139 = sadd.s32 %s138, 1
      %p142 = scmp.eq.s32.totalorder %s20, 1
      %p143 = scmp.ne.s32.totalorder %s138, %s140
      %p144 = scmp.eq.s32.totalorder %s20, 0
      %p145 = por %p143, %p144
      %p146 = scmp.ne.s32.totalorder %s138, %s140
      %p147 = scmp.eq.s32.totalorder %s25, 1
      %p148 = por %p146, %p147
      %p149 = scmp.ne.s32.totalorder %s140, %s141
      %p150 = scmp.eq.s32.totalorder %s25, 0
      %p151 = por %p149, %p150
      %p152 = scmp.ne.s32.totalorder %s140, %s141
      %p153 = scmp.eq.s32.totalorder %s26, 1
      %p154 = por %p152, %p153
      %p156 = scmp.ne.s32.totalorder %s141, %s155
      %p157 = scmp.eq.s32.totalorder %s26, 0
      %p158 = por %p156, %p157
      %s159 = ssub.s32 %s20, %s27
      %p160 = scmp.eq.s32.totalorder %s159, 0
      %s162 = sadd.s32 %s161, 1
      %s163 = scalar_select %p160, %s161, %s162
      %p166 = pneg %p160
      %p167 = scmp.eq.s32.totalorder %s20, 1
      %p168 = por %p166, %p167
      %p169 = scmp.ne.s32.totalorder %s161, %s164
      %p170 = scmp.eq.s32.totalorder %s20, 0
      %p171 = por %p169, %p170
      %p172 = scmp.ne.s32.totalorder %s161, %s164
      %p173 = scmp.eq.s32.totalorder %s25, 1
      %p174 = por %p172, %p173
      %p175 = scmp.ne.s32.totalorder %s164, %s165
      %p176 = scmp.eq.s32.totalorder %s25, 0
      %p177 = por %p175, %p176
      %p178 = scmp.ne.s32.totalorder %s164, %s165
      %p179 = scmp.eq.s32.totalorder %s26, 1
      %p180 = por %p178, %p179
      %p182 = scmp.ne.s32.totalorder %s165, %s181
      %p183 = scmp.eq.s32.totalorder %s26, 0
      %p184 = por %p182, %p183
      %s185 = ssub.s32 %s20, %s27
      %p186 = scmp.eq.s32.totalorder %s185, 0
      %s188 = sadd.s32 %s187, 1
      %s189 = scalar_select %p186, %s187, %s188
      %p192 = pneg %p186
      %p193 = scmp.eq.s32.totalorder %s20, 1
      %p194 = por %p192, %p193
      %p195 = scmp.ne.s32.totalorder %s187, %s190
      %p196 = scmp.eq.s32.totalorder %s20, 0
      %p197 = por %p195, %p196
      %p198 = scmp.ne.s32.totalorder %s187, %s190
      %p199 = scmp.eq.s32.totalorder %s25, 1
      %p200 = por %p198, %p199
      %p201 = scmp.ne.s32.totalorder %s190, %s191
      %p202 = scmp.eq.s32.totalorder %s25, 0
      %p203 = por %p201, %p202
      %p204 = scmp.ne.s32.totalorder %s190, %s191
      %p205 = scmp.eq.s32.totalorder %s26, 1
      %p206 = por %p204, %p205
      %p208 = scmp.ne.s32.totalorder %s191, %s207
      %p209 = scmp.eq.s32.totalorder %s26, 0
      %p210 = por %p208, %p209
      %p211 = scmp.le.s32.totalorder 1, %s20
      %p212 = scmp.lt.s32.totalorder %s20, 3
      %p213 = pnand %p211, %p212
      %p214 = pneg %p213
      // Predicated region
      $region9: #{tpu_custom_call.1} parent=5 // pred_check
        _
      $region10: #{tpu_custom_call.1} parent=5 // pred_check_branch
        %216 = sbr.rel (%p213) target = $region12
      $region11: #{tpu_custom_call.1} parent=5 // pred_region
        %s217 = ssub.s32 %s20, 1
        // Predicated region
        $region13: #{tpu_custom_call.1} parent=11 // pred_check
          %p218 = pneg %p67
        $region14: #{tpu_custom_call.1} parent=11 // pred_check_branch
          %220 = sbr.rel (%p218) target = $region16
        $region15: #{tpu_custom_call.1} parent=11 // pred_region
          _
        $region16: #{tpu_custom_call.1} parent=11 // pred_fallthru
          _
        // Predicated region
        $region17: #{tpu_custom_call.1} parent=11 // pred_check
          %p221 = pneg %p88
        $region18: #{tpu_custom_call.1} parent=11 // pred_check_branch
          %223 = sbr.rel (%p221) target = $region20
        $region19: #{tpu_custom_call.1} parent=11 // pred_region
          _
        $region20: #{tpu_custom_call.1} parent=11 // pred_fallthru
          _
        // Predicated region
        $region21: #{tpu_custom_call.1} parent=11 // pred_check
          %p224 = pneg %p109
        $region22: #{tpu_custom_call.1} parent=11 // pred_check_branch
          %226 = sbr.rel (%p224) target = $region24
        $region23: #{tpu_custom_call.1} parent=11 // pred_region
          _
        $region24: #{tpu_custom_call.1} parent=11 // pred_fallthru
          _
        // Predicated region
        $region25: #{tpu_custom_call.1} parent=11 // pred_check
          %p227 = pneg %p130
        $region26: #{tpu_custom_call.1} parent=11 // pred_check_branch
          %229 = sbr.rel (%p227) target = $region28
        $region27: #{tpu_custom_call.1} parent=11 // pred_region
          _
        $region28: #{tpu_custom_call.1} parent=11 // pred_fallthru
          _
        // Predicated region
        $region29: #{tpu_custom_call.1} parent=11 // pred_check
          %p230 = pneg %p151
        $region30: #{tpu_custom_call.1} parent=11 // pred_check_branch
          %232 = sbr.rel (%p230) target = $region32
        $region31: #{tpu_custom_call.1} parent=11 // pred_region
          _
        $region32: #{tpu_custom_call.1} parent=11 // pred_fallthru
          _
      $region12: #{tpu_custom_call.1} parent=5 // pred_fallthru
        _
      %p233 = scmp.lt.s32.totalorder %s20, 2
      // Predicated region
      $region33: #{tpu_custom_call.1} parent=5 // pred_check
        %p234 = pneg %p233
      $region34: #{tpu_custom_call.1} parent=5 // pred_check_branch
        %236 = sbr.rel (%p234) target = $region36
      $region35: #{tpu_custom_call.1} parent=5 // pred_region
        // Predicated region
        $region37: #{tpu_custom_call.1} parent=35 // pred_check
          %p237 = pneg %p40
        $region38: #{tpu_custom_call.1} parent=35 // pred_check_branch
          %239 = sbr.rel (%p237) target = $region40
        $region39: #{tpu_custom_call.1} parent=35 // pred_region
          %s240 = sand.u32 %s30, 1
          %s241 = scalar_lea.sflag [#allocation3], %s240
          %s242 = sand.u32 %s30, 1
          %s243 = smul.addr %s242, 32
          %s244 = scalar_lea.vmem [#allocation2], %s243
          %s246 = ssub.s32 512, 512
          %247 = vsyncadd %s241, %s246
          %s248 = smul.addr %s20, 4
          %s249 = smul.addr %s248, 128
          %s250 = scalar_lea.hbm %s0, %s249
          %s252 = sshll.u32 %s244, 4
          %s253 = int_to_ptr.vmem [resolvable:$true] %s252
          %255 = dma.hbm_to_vmem [thread:$0]  %s250, 512, %s253, %s241
        $region40: #{tpu_custom_call.1} parent=35 // pred_fallthru
          _
      $region36: #{tpu_custom_call.1} parent=5 // pred_fallthru
        _
      %p256 = scmp.le.s32.totalorder 1, %s20
      %p257 = scmp.lt.s32.totalorder %s20, 3
      %p258 = pnand %p256, %p257
      %p259 = pneg %p258
      // Predicated region
      $region41: #{tpu_custom_call.1} parent=5 // pred_check
        _
      $region42: #{tpu_custom_call.1} parent=5 // pred_check_branch
        %261 = sbr.rel (%p258) target = $region44
      $region43: #{tpu_custom_call.1} parent=5 // pred_region
        %s262 = ssub.s32 %s20, 1
        %s263 = sand.u32 %s33, 1
        %s264 = scalar_lea.sflag [#allocation3], %s263
        %s265 = sand.u32 %s33, 1
        %s266 = smul.addr %s265, 32
        %s267 = scalar_lea.vmem [#allocation2], %s266
        // Predicated region
        $region45: #{tpu_custom_call.1} parent=43 // pred_check
          %p268 = pneg %p46
        $region46: #{tpu_custom_call.1} parent=43 // pred_check_branch
          %270 = sbr.rel (%p268) target = $region48
        $region47: #{tpu_custom_call.1} parent=43 // pred_region
          %271 = dma.done %s264, 512
        $region48: #{tpu_custom_call.1} parent=43 // pred_fallthru
          _
        %s272 = sand.u32 %s33, 1
        %s273 = scalar_lea.sflag [#allocation3], %s272
        %s274 = sand.u32 %s33, 1
        %s275 = smul.addr %s274, 32
        %s276 = scalar_lea.vmem [#allocation2], %s275
        %p277 = pneg %p46
        %p278 = pneg %p43
        %p279 = pneg %p67
        %p280 = pneg %p64
        %p281 = pneg %p88
        %p282 = pneg %p85
        %p283 = pneg %p109
        %p284 = pneg %p106
        %p285 = pneg %p130
        %p286 = pneg %p127
        %p287 = pneg %p151
        %p288 = pneg %p148
        %p289 = pneg %p177
        %p290 = pneg %p174
        %s291 = sand.u32 %s164, 1
        %s292 = scalar_lea.sflag [#allocation4], %s291
        %s293 = sand.u32 %s164, 1
        %s294 = smul.addr %s293, 16
        %s295 = scalar_lea.vmem [#allocation5], %s294
        %p296 = pneg %p203
        %p297 = pneg %p200
        %p298 = scmp.lt.s32.totalorder %s25, 1
        %s299 = scalar_select %p298, %s25, 1
        %s300 = smul.addr %s299, 4
        %s301 = scalar_lea.vmem %s7, %s300
        %p302 = scmp.lt.s32.totalorder %s25, 1
        %s303 = scalar_select %p302, %s25, 1
        %s304 = smul.addr %s303, 4
        %s305 = scalar_lea.vmem %s7, %s304
        %v306 = vld [vmem:[%s267] sm:$0xff]
        %v307 = vld [vmem:[%s267 + $0x8] sm:$0xff]
        %v308 = vld [vmem:[%s267 + $0x10] sm:$0xff]
        %v309 = vld [vmem:[%s267 + $0x18] sm:$0xff]
        %v310 = vld [vmem:[%s5] sm:$0xf]
        %vm311 = vcmask 199680
        %312 = vst.msk [vmem:[%s295] sm:$0xf] %vm311, 0.0
        %vm313 = vcmask 584904
        %314 = vst.msk [vmem:[%s295 + $0xc] sm:$0xf] %vm313, 0.0
        %319 = vrot.lane.b32.xlu0 %v306, 127
        %v320 = vpop.permute.xlu0 %319
        %321 = vrot.lane.b32.xlu0 %v307, 127
        %v322 = vpop.permute.xlu0 %321
        %323 = vrot.lane.b32.xlu0 %v308, 127
        %v324 = vpop.permute.xlu0 %323
        %325 = vrot.lane.b32.xlu0 %v309, 127
        %v326 = vpop.permute.xlu0 %325
        %vm327 = vcmask 1039360
        %v328 = vsel %vm327, %v320, %v322
        %v329 = vsel %vm327, %v322, %v324
        %v330 = vsel %vm327, %v324, %v326
        %334 = vrot.lane.b32.xlu0 %v306, 126
        %v335 = vpop.permute.xlu0 %334
        %336 = vrot.lane.b32.xlu0 %v307, 126
        %v337 = vpop.permute.xlu0 %336
        %338 = vrot.lane.b32.xlu0 %v308, 126
        %v339 = vpop.permute.xlu0 %338
        %340 = vrot.lane.b32.xlu0 %v309, 126
        %v341 = vpop.permute.xlu0 %340
        %vm342 = vcmask 1031168
        %v343 = vsel %vm342, %v335, %v337
        %v344 = vsel %vm342, %v337, %v339
        %v345 = vsel %vm342, %v339, %v341
        %349 = vrot.lane.b32.xlu0 %v306, 104
        %v350 = vpop.permute.xlu0 %349
        %351 = vrot.lane.b32.xlu0 %v307, 104
        %v352 = vpop.permute.xlu0 %351
        %353 = vrot.lane.b32.xlu0 %v308, 104
        %v354 = vpop.permute.xlu0 %353
        %355 = vrot.lane.b32.xlu0 %v309, 104
        %v356 = vpop.permute.xlu0 %355
        %vm357 = vcmask 850944
        %v358 = vsel %vm357, %v350, %v352
        %v359 = vsel %vm357, %v352, %v354
        %v360 = vsel %vm357, %v354, %v356
        %364 = vrot.lane.b32.xlu0 %v306, 103
        %v365 = vpop.permute.xlu0 %364
        %366 = vrot.lane.b32.xlu0 %v307, 103
        %v367 = vpop.permute.xlu0 %366
        %368 = vrot.lane.b32.xlu0 %v308, 103
        %v369 = vpop.permute.xlu0 %368
        %370 = vrot.lane.b32.xlu0 %v309, 103
        %v371 = vpop.permute.xlu0 %370
        %vm372 = vcmask 842752
        %v373 = vsel %vm372, %v365, %v367
        %v374 = vsel %vm372, %v367, %v369
        %v375 = vsel %vm372, %v369, %v371
        %379 = vrot.lane.b32.xlu0 %v306, 102
        %v380 = vpop.permute.xlu0 %379
        %381 = vrot.lane.b32.xlu0 %v307, 102
        %v382 = vpop.permute.xlu0 %381
        %383 = vrot.lane.b32.xlu0 %v308, 102
        %v384 = vpop.permute.xlu0 %383
        %385 = vrot.lane.b32.xlu0 %v309, 102
        %v386 = vpop.permute.xlu0 %385
        %vm387 = vcmask 834560
        %v388 = vsel %vm387, %v380, %v382
        %v389 = vsel %vm387, %v382, %v384
        %v390 = vsel %vm387, %v384, %v386
        %394 = vrot.lane.b32.xlu0 %v306, 80
        %v395 = vpop.permute.xlu0 %394
        %396 = vrot.lane.b32.xlu0 %v307, 80
        %v397 = vpop.permute.xlu0 %396
        %398 = vrot.lane.b32.xlu0 %v308, 80
        %v399 = vpop.permute.xlu0 %398
        %400 = vrot.lane.b32.xlu0 %v309, 80
        %v401 = vpop.permute.xlu0 %400
        %vm402 = vcmask 654336
        %v403 = vsel %vm402, %v395, %v397
        %v404 = vsel %vm402, %v397, %v399
        %v405 = vsel %vm402, %v399, %v401
        %409 = vrot.lane.b32.xlu0 %v306, 79
        %v410 = vpop.permute.xlu0 %409
        %411 = vrot.lane.b32.xlu0 %v307, 79
        %v412 = vpop.permute.xlu0 %411
        %413 = vrot.lane.b32.xlu0 %v308, 79
        %v414 = vpop.permute.xlu0 %413
        %415 = vrot.lane.b32.xlu0 %v309, 79
        %v416 = vpop.permute.xlu0 %415
        %vm417 = vcmask 646144
        %v418 = vsel %vm417, %v410, %v412
        %v419 = vsel %vm417, %v412, %v414
        %v420 = vsel %vm417, %v414, %v416
        %424 = vrot.lane.b32.xlu0 %v306, 78
        %v425 = vpop.permute.xlu0 %424
        %426 = vrot.lane.b32.xlu0 %v307, 78
        %v427 = vpop.permute.xlu0 %426
        %428 = vrot.lane.b32.xlu0 %v308, 78
        %v429 = vpop.permute.xlu0 %428
        %430 = vrot.lane.b32.xlu0 %v309, 78
        %v431 = vpop.permute.xlu0 %430
        %vm432 = vcmask 637952
        %v433 = vsel %vm432, %v425, %v427
        %v434 = vsel %vm432, %v427, %v429
        %v435 = vsel %vm432, %v429, %v431
        %vm439 = vcmask 588800
        %v441 = vsel %vm439, %v310, 0
        %443 = vmatprep.subr.mxu0 0.0
        %444 = vmatpush1.msra.mxu0 0.0
        %445 = vmatprep.subr.mxu0 0.0
        %446 = vmatpush1.msra.mxu0 0.0
        %447 = vmatprep.subr.mxu0 0.0
        %448 = vmatpush1.msra.mxu0 0.0
        %449 = vmatprep.subr.mxu0 0.0
        %450 = vmatpush1.msra.mxu0 0.0
        %451 = vmatprep.subr.mxu0 0.0
        %452 = vmatpush1.msra.mxu0 0.0
        %453 = vmatprep.subr.mxu0 0.0
        %454 = vmatpush1.msra.mxu0 0.0
        %455 = vmatprep.subr.mxu0 0.0
        %456 = vmatpush1.msra.mxu0 0.0
        %457 = vmatprep.subr.mxu0 %v434
        %458 = vmatpush1.msra.mxu0 %v433
        %459 = vmatprep.subr.mxu0 %v419
        %460 = vmatpush1.msra.mxu0 %v418
        %461 = vmatprep.subr.mxu0 %v404
        %462 = vmatpush1.msra.mxu0 %v403
        %463 = vmatprep.subr.mxu0 %v389
        %464 = vmatpush1.msra.mxu0 %v388
        %465 = vmatprep.subr.mxu0 %v374
        %466 = vmatpush1.msra.mxu0 %v373
        %467 = vmatprep.subr.mxu0 %v359
        %468 = vmatpush1.msra.mxu0 %v358
        %469 = vmatprep.subr.mxu0 %v344
        %470 = vmatpush1.msra.mxu0 %v343
        %471 = vmatprep.subr.mxu0 %v329
        %472 = vmatpush1.msra.mxu0 %v328
        %473 = vmatprep.subr.mxu0 %v307
        %474 = vmatpush1.msra.mxu0 %v306
        %475 = vmatprep.subr.mxu0 0.0
        %476 = vmatpush2.msra.mxu0 0.0
        %477 = vmatprep.subr.mxu0 0.0
        %478 = vmatpush2.msra.mxu0 0.0
        %479 = vmatprep.subr.mxu0 0.0
        %480 = vmatpush2.msra.mxu0 0.0
        %481 = vmatprep.subr.mxu0 0.0
        %482 = vmatpush2.msra.mxu0 0.0
        %483 = vmatprep.subr.mxu0 0.0
        %484 = vmatpush2.msra.mxu0 0.0
        %485 = vmatprep.subr.mxu0 0.0
        %486 = vmatpush2.msra.mxu0 0.0
        %487 = vmatprep.subr.mxu0 0.0
        %488 = vmatpush2.msra.mxu0 0.0
        %489 = vmatprep.subr.mxu0 0.0
        %490 = vmatpush2.msra.mxu0 0.0
        %491 = vmatprep.subr.mxu0 0.0
        %492 = vmatpush2.msra.mxu0 0.0
        %493 = vmatprep.subr.mxu0 0.0
        %494 = vmatpush2.msra.mxu0 0.0
        %495 = vmatprep.subr.mxu0 0.0
        %496 = vmatpush2.msra.mxu0 0.0
        %497 = vmatprep.subr.mxu0 0.0
        %498 = vmatpush2.msra.mxu0 0.0
        %499 = vmatprep.subr.mxu0 0.0
        %500 = vmatpush2.msra.mxu0 0.0
        %501 = vmatprep.subr.mxu0 0.0
        %502 = vmatpush2.msra.mxu0 0.0
        %503 = vmatprep.subr.mxu0 0.0
        %504 = vmatpush2.msra.mxu0 0.0
        %505 = vmatprep.subr.mxu0 0.0
        %506 = vmatpush2.msra.mxu0 0.0
        %507 = vmatprep.mubr.f32.mxu0 0.0
        %508 = vmatmul.mubr.f32.gmra.mxu0 %v441
        %v509 = vpop.f32.mrf.mxu0
        %v510 = vadd.f32 0.0, %v509
        %v511 = vpop.f32.mrf.mxu0
        %v512 = vadd.f32 0.0, %v511
        %513 = vdwg.mxu0
        %514 = vmatprep.subr.mxu0 0.0
        %515 = vmatpush1.msra.mxu0 0.0
        %516 = vmatprep.subr.mxu0 0.0
        %517 = vmatpush1.msra.mxu0 0.0
        %518 = vmatprep.subr.mxu0 0.0
        %519 = vmatpush1.msra.mxu0 0.0
        %520 = vmatprep.subr.mxu0 0.0
        %521 = vmatpush1.msra.mxu0 0.0
        %522 = vmatprep.subr.mxu0 0.0
        %523 = vmatpush1.msra.mxu0 0.0
        %524 = vmatprep.subr.mxu0 0.0
        %525 = vmatpush1.msra.mxu0 0.0
        %526 = vmatprep.subr.mxu0 0.0
        %527 = vmatpush1.msra.mxu0 0.0
        %528 = vmatprep.subr.mxu0 0.0
        %529 = vmatpush1.msra.mxu0 %v435
        %530 = vmatprep.subr.mxu0 0.0
        %531 = vmatpush1.msra.mxu0 %v420
        %532 = vmatprep.subr.mxu0 0.0
        %533 = vmatpush1.msra.mxu0 %v405
        %534 = vmatprep.subr.mxu0 0.0
        %535 = vmatpush1.msra.mxu0 %v390
        %536 = vmatprep.subr.mxu0 0.0
        %537 = vmatpush1.msra.mxu0 %v375
        %538 = vmatprep.subr.mxu0 0.0
        %539 = vmatpush1.msra.mxu0 %v360
        %540 = vmatprep.subr.mxu0 0.0
        %541 = vmatpush1.msra.mxu0 %v345
        %542 = vmatprep.subr.mxu0 0.0
        %543 = vmatpush1.msra.mxu0 %v330
        %544 = vmatprep.subr.mxu0 0.0
        %545 = vmatpush1.msra.mxu0 %v308
        %546 = vmatprep.subr.mxu0 0.0
        %547 = vmatpush2.msra.mxu0 0.0
        %548 = vmatprep.subr.mxu0 0.0
        %549 = vmatpush2.msra.mxu0 0.0
        %550 = vmatprep.subr.mxu0 0.0
        %551 = vmatpush2.msra.mxu0 0.0
        %552 = vmatprep.subr.mxu0 0.0
        %553 = vmatpush2.msra.mxu0 0.0
        %554 = vmatprep.subr.mxu0 0.0
        %555 = vmatpush2.msra.mxu0 0.0
        %556 = vmatprep.subr.mxu0 0.0
        %557 = vmatpush2.msra.mxu0 0.0
        %558 = vmatprep.subr.mxu0 0.0
        %559 = vmatpush2.msra.mxu0 0.0
        %560 = vmatprep.subr.mxu0 0.0
        %561 = vmatpush2.msra.mxu0 0.0
        %562 = vmatprep.subr.mxu0 0.0
        %563 = vmatpush2.msra.mxu0 0.0
        %564 = vmatprep.subr.mxu0 0.0
        %565 = vmatpush2.msra.mxu0 0.0
        %566 = vmatprep.subr.mxu0 0.0
        %567 = vmatpush2.msra.mxu0 0.0
        %568 = vmatprep.subr.mxu0 0.0
        %569 = vmatpush2.msra.mxu0 0.0
        %570 = vmatprep.subr.mxu0 0.0
        %571 = vmatpush2.msra.mxu0 0.0
        %572 = vmatprep.subr.mxu0 0.0
        %573 = vmatpush2.msra.mxu0 0.0
        %574 = vmatprep.subr.mxu0 0.0
        %575 = vmatpush2.msra.mxu0 0.0
        %576 = vmatprep.subr.mxu0 0.0
        %577 = vmatpush2.msra.mxu0 0.0
        %578 = vmatprep.mubr.f32.mxu0 0.0
        %579 = vmatmul.mubr.f32.gmra.mxu0 %v441
        %v580 = vpop.f32.mrf.mxu0
        %v581 = vadd.f32 0.0, %v580
        %v582 = vpop.f32.mrf.mxu0
        %583 = vdwg.mxu0
        %v587 = vcombine.low %v510, %v512
        %588 = vrot.lane.b32.xlu0 %v587, 25
        %v589 = vpop.permute.xlu0 %588
        %590 = vrot.lane.b32.xlu0 %v581, 25
        %v591 = vpop.permute.xlu0 %590
        %v592 = vrot.slane %v589, 4
        %v593 = vrot.slane %v591, 4
        %vm594 = vcmask 203776
        %v595 = vsel %vm594, %v592, %v589
        %vm596 = vcmask 1043456
        %v597 = vsel %vm596, %v592, %v593
        %v598 = vsel %vm594, %v597, %v591
        %vm601 = vcmask 1043656
        %vm602 = vcmask 1047556
        %vm603 = vmor %vm602, %vm601
        %604 = vst.msk [vmem:[%s295] sm:$0xff] %vm603, %v595
        %vm605 = vcmask 203780
        %vm606 = vmor %vm605, %vm596
        %607 = vst.msk [vmem:[%s295 + $0x8] sm:$0xff] %vm606, %v598
        %v608 = vld [vmem:[%s2] sm:$0x7]
        %vm609 = vcmp.gt.f32.partialorder %v608, 0.5
        %v610 = vsel %vm609, 1, 0
        %v611 = vlaneseq
        %v612 = vshrl.u32 %v611, 7
        %v613 = vsub.s32 0, %v612
        %v614 = vrot.slane %v610, %v613
        %v615 = vlaneseq
        %v616 = vshrl.u32 %v615, 7
        %v617 = vsub.s32 1, %v616
        %v618 = vrot.slane %v610, %v617
        %v619 = vlaneseq
        %v620 = vshrl.u32 %v619, 7
        %v621 = vsub.s32 2, %v620
        %v622 = vrot.slane %v610, %v621
        %vm623 = vcmp.eq.s32.totalorder %v614, 1
        %vm624 = vcmp.eq.s32.totalorder %v618, 1
        %vm625 = vcmp.eq.s32.totalorder %v622, 1
        %v626 = vsel %vm623, %v510, 0.0
        %v627 = vsel %vm624, %v512, 0.0
        %v628 = vsel %vm625, %v581, 0.0
        %v629 = vsel %vm596, %v626, 0.0
        %v630 = vsel %vm596, %v627, 0.0
        %v631 = vadd.f32 %v629, %v630
        %v632 = vsel %vm596, %v628, 0.0
        %v633 = vadd.f32 %v631, %v632
        %634 = vadd.xlane.f32.xlu0 %v633
        %v635 = vpop.xlane.xlu0 %634
        %v636 = vadd.f32 %v635, 0.0
        %v637 = vmul.f32 %v626, %v510
        %v638 = vmul.f32 %v627, %v512
        %v639 = vmul.f32 %v628, %v581
        %v640 = vsel %vm596, %v637, 0.0
        %v641 = vsel %vm596, %v638, 0.0
        %v642 = vadd.f32 %v640, %v641
        %v643 = vsel %vm596, %v639, 0.0
        %v644 = vadd.f32 %v642, %v643
        %645 = vadd.xlane.f32.xlu0 %v644
        %v646 = vpop.xlane.xlu0 %645
        %v647 = vadd.f32 %v646, 0.0
        %vm648 = vcmask 7168
        %v649 = vsel %vm648, %v636, %v647
        %vm650 = vcmask 11264
        %651 = vst.msk [vmem:[%s305] sm:$0xf] %vm650, %v649
        %s652 = sand.u32 %s164, 1
        %s653 = scalar_lea.sflag [#allocation4], %s652
        %s654 = sand.u32 %s164, 1
        %s655 = smul.addr %s654, 16
        %s656 = scalar_lea.vmem [#allocation5], %s655
        %p657 = scmp.lt.s32.totalorder %s25, 1
        %s658 = scalar_select %p657, %s25, 1
        %s659 = smul.addr %s658, 4
        %s660 = scalar_lea.vmem %s7, %s659
        // Predicated region
        $region49: #{tpu_custom_call.1} parent=43 // pred_check
          %p661 = pneg %p174
        $region50: #{tpu_custom_call.1} parent=43 // pred_check_branch
          %663 = sbr.rel (%p661) target = $region52
        $region51: #{tpu_custom_call.1} parent=43 // pred_region
          %s665 = ssub.s32 256, 256
          %666 = vsyncadd %s653, %s665
          %s667 = smul.addr %s25, 4
          %s668 = smul.addr %s667, 64
          %s669 = scalar_lea.hbm %s6, %s668
          %s671 = sshll.u32 %s656, 4
          %s672 = int_to_ptr.vmem [resolvable:$true] %s671
          %674 = dma.vmem_to_hbm [thread:$0]  %s672, 256, %s669, %s653
        $region52: #{tpu_custom_call.1} parent=43 // pred_fallthru
          _
        // Predicated region
        $region53: #{tpu_custom_call.1} parent=43 // pred_check
          %p675 = pneg %p200
        $region54: #{tpu_custom_call.1} parent=43 // pred_check_branch
          %677 = sbr.rel (%p675) target = $region56
        $region55: #{tpu_custom_call.1} parent=43 // pred_region
          _
        $region56: #{tpu_custom_call.1} parent=43 // pred_fallthru
          _
      $region44: #{tpu_custom_call.1} parent=5 // pred_fallthru
        _
      %p678 = scmp.le.s32.totalorder 2, %s20
      // Predicated region
      $region57: #{tpu_custom_call.1} parent=5 // pred_check
        %p679 = pneg %p678
      $region58: #{tpu_custom_call.1} parent=5 // pred_check_branch
        %681 = sbr.rel (%p679) target = $region60
      $region59: #{tpu_custom_call.1} parent=5 // pred_region
        %s682 = ssub.s32 %s20, 2
        // Predicated region
        $region61: #{tpu_custom_call.1} parent=59 // pred_check
          %p683 = pneg %p180
        $region62: #{tpu_custom_call.1} parent=59 // pred_check_branch
          %685 = sbr.rel (%p683) target = $region64
        $region63: #{tpu_custom_call.1} parent=59 // pred_region
          %s686 = sand.u32 %s165, 1
          %s687 = scalar_lea.sflag [#allocation4], %s686
          %s688 = sand.u32 %s165, 1
          %s689 = smul.addr %s688, 16
          %s690 = scalar_lea.vmem [#allocation5], %s689
          %691 = dma.done %s687, 256
        $region64: #{tpu_custom_call.1} parent=59 // pred_fallthru
          _
        // Predicated region
        $region65: #{tpu_custom_call.1} parent=59 // pred_check
          %p692 = pneg %p206
        $region66: #{tpu_custom_call.1} parent=59 // pred_check_branch
          %694 = sbr.rel (%p692) target = $region68
        $region67: #{tpu_custom_call.1} parent=59 // pred_region
          %p695 = scmp.lt.s32.totalorder %s26, 1
          %s696 = scalar_select %p695, %s26, 1
          %s697 = smul.addr %s696, 4
          %s698 = scalar_lea.vmem %s7, %s697
        $region68: #{tpu_custom_call.1} parent=59 // pred_fallthru
          _
      $region60: #{tpu_custom_call.1} parent=5 // pred_fallthru
        _
    $region6: #{tpu_custom_call.1} parent=1 // loop_footer
      %s24 = sadd.s32 1, %s20
    $region7: #{tpu_custom_call.1} parent=1 // loop_footer_branch
      %19 = sbr.rel target = $region3
    $region8: #{tpu_custom_call.1} parent=1 // loop_exit
      _
    %699 = vsyncpa [#allocation3], 1
    %s700 = scalar_lea.sflag [#allocation3], 1
    %701 = vsyncpa %s700, 1
    %702 = vsyncpa [#allocation4], 1
    %s703 = scalar_lea.sflag [#allocation4], 1
    %704 = vsyncpa %s703, 1

</llo_original>
